<compile_context>
chip_gen: v6e
topology: v6e:2x2x1
jax: 0.10.0
libtpu: 0.0.40
codegen_flags: <defaults>
</compile_context>

<pallas_src>
import functools

import jax
import jax.numpy as jnp
from jax import lax
from jax.experimental import pallas as pl
from jax.experimental.pallas import tpu as pltpu


def _round_up(x, m):
    return (x + m - 1) // m * m


def _rbm_kernel(k, v_ref, w_ref, wt_ref, hb_ref, vb_ref, hn_ref, vn_ref,
                vout_ref):
    """One batch tile of the CD-k Gibbs chain.

    v_ref   : (TB, n_vis)       input visibles (f32)
    w_ref   : (n_hid, n_vis)    weights, bf16   (VMEM resident across tiles)
    wt_ref  : (n_vis, n_hid)    weights^T, bf16 (VMEM resident across tiles)
    hb_ref  : (1, n_hid)        hidden bias, f32
    vb_ref  : (1, n_vis)        visible bias, f32
    hn_ref  : (k+1, TB, n_hid)  logistic noise for hidden sampling, f32
    vn_ref  : (k,   TB, n_vis)  logistic noise for visible sampling, f32
    vout_ref: (TB, n_vis)       sampled visibles after k Gibbs steps
    """
    W = w_ref[...]            # bf16 (n_hid, n_vis)
    WT = wt_ref[...]          # bf16 (n_vis, n_hid)
    hb = hb_ref[...]          # f32  (1, n_hid)
    vb = vb_ref[...]          # f32  (1, n_vis)

    def vis_hid_logits(x):    # (TB, n_vis) bf16 -> (TB, n_hid) f32
        return lax.dot_general(
            x, WT, dimension_numbers=(((1,), (0,)), ((), ())),
            preferred_element_type=jnp.float32) + hb

    def hid_vis_logits(h):    # (TB, n_hid) bf16 -> (TB, n_vis) f32
        return lax.dot_general(
            h, W, dimension_numbers=(((1,), (0,)), ((), ())),
            preferred_element_type=jnp.float32) + vb

    def sample(logits, noise):
        # relu(sign(sigmoid(x) - U)) == 1{sigmoid(x) > U} == 1{x > logit(U)},
        # and logit(U) ~ Logistic(0,1) is supplied as `noise`: one compare +
        # one select on the VPU, no sigmoid/divide on the critical path.
        return jnp.where(logits > noise, 1.0, 0.0).astype(jnp.bfloat16)

    v0 = v_ref[...].astype(jnp.bfloat16)      # {0,1}/data -> bf16 MXU operand
    h_ = sample(vis_hid_logits(v0), hn_ref[0])

    if k <= 4:
        v_ = v0                                # k >= 1 required (as in PyTorch)
        for step in range(k):                  # small static k: fully unrolled
            v_ = sample(hid_vis_logits(h_), vn_ref[step])
            h_ = sample(vis_hid_logits(v_), hn_ref[step + 1])
    else:
        def body(step, carry):
            h_c, _ = carry
            v_n = sample(hid_vis_logits(h_c), vn_ref[step])
            h_n = sample(vis_hid_logits(v_n), hn_ref[step + 1])
            return h_n, v_n
        h_, v_ = lax.fori_loop(0, k, body, (h_, v0))

    vout_ref[...] = v_.astype(vout_ref.dtype)


def _prepare(v, W, v_bias, h_bias, k, key, batch_tile):
    """Pad to TPU-friendly shapes and precompute the logistic sampling noise."""
    B, n_vis = v.shape
    n_hid = W.shape[0]

    n_vis_p = _round_up(n_vis, 128)
    n_hid_p = _round_up(n_hid, 128)
    TB = min(batch_tile, _round_up(B, 8))      # lane/sublane-aligned tile
    B_p = _round_up(B, TB)

    # Zero padding: extra W rows (hidden) / cols (visible) are zero, so padded
    # units never influence real logits; padded batch rows are sliced off.
    v_p = jnp.zeros((B_p, n_vis_p), jnp.float32).at[:B, :n_vis].set(
        v.astype(jnp.float32))
    W_p = jnp.zeros((n_hid_p, n_vis_p), jnp.float32).at[:n_hid, :n_vis].set(
        W.astype(jnp.float32))
    w_bf = W_p.astype(jnp.bfloat16)
    wt_bf = W_p.T.astype(jnp.bfloat16)          # transpose once, outside kernel
    hb = jnp.zeros((1, n_hid_p), jnp.float32).at[0, :n_hid].set(
        h_bias.astype(jnp.float32))
    vb = jnp.zeros((1, n_vis_p), jnp.float32).at[0, :n_vis].set(
        v_bias.astype(jnp.float32))

    # One logistic-noise slab per sampling event: k+1 hidden draws, k visible.
    kh, kv = jax.random.split(key)
    hn = jax.random.logistic(kh, (k + 1, B_p, n_hid_p), jnp.float32)
    vn = jax.random.logistic(kv, (k, B_p, n_vis_p), jnp.float32)

    return dict(v_p=v_p, w_bf=w_bf, wt_bf=wt_bf, hb=hb, vb=vb, hn=hn, vn=vn,
                TB=TB, B_p=B_p, n_vis_p=n_vis_p, n_hid_p=n_hid_p)


def _run_kernel(prep, k, out_dtype):
    TB, B_p = prep["TB"], prep["B_p"]
    n_vis_p, n_hid_p = prep["n_vis_p"], prep["n_hid_p"]
    grid = (B_p // TB,)

    return pl.pallas_call(
        functools.partial(_rbm_kernel, k),
        out_shape=jax.ShapeDtypeStruct((B_p, n_vis_p), out_dtype),
        grid=grid,
        in_specs=[
            pl.BlockSpec((TB, n_vis_p), lambda i: (i, 0)),            # v tile
            pl.BlockSpec((n_hid_p, n_vis_p), lambda i: (0, 0)),       # W   (resident)
            pl.BlockSpec((n_vis_p, n_hid_p), lambda i: (0, 0)),       # W^T (resident)
            pl.BlockSpec((1, n_hid_p), lambda i: (0, 0)),             # h_bias
            pl.BlockSpec((1, n_vis_p), lambda i: (0, 0)),             # v_bias
            pl.BlockSpec((k + 1, TB, n_hid_p), lambda i: (0, i, 0)),  # hidden noise
            pl.BlockSpec((k, TB, n_vis_p), lambda i: (0, i, 0)),      # visible noise
        ],
        out_specs=pl.BlockSpec((TB, n_vis_p), lambda i: (i, 0)),
        compiler_params=pltpu.CompilerParams(
            dimension_semantics=("parallel",)),
    )(prep["v_p"], prep["w_bf"], prep["wt_bf"], prep["hb"], prep["vb"],
      prep["hn"], prep["vn"])


def rbm_forward(v, W, v_bias, h_bias, *, k, key, batch_tile=256):
    """Returns (v, v_) exactly like RBM.forward (noise from `key`)."""
    assert k >= 1, "RBM.forward requires k >= 1 (v_ undefined otherwise)"
    B, n_vis = v.shape
    prep = _prepare(v, W, v_bias, h_bias, k, key, batch_tile)
    v_out = _run_kernel(prep, k, v.dtype)
    return v, v_out[:B, :n_vis]


def _reference(prep, k):
    """Pure-JAX replica of the kernel math (same padded bf16 inputs, same noise)."""
    w_bf, wt_bf = prep["w_bf"], prep["wt_bf"]
    hb, vb, hn, vn = prep["hb"], prep["vb"], prep["hn"], prep["vn"]

    def sample(logits, noise):
        return jnp.where(logits > noise, 1.0, 0.0).astype(jnp.bfloat16)

    def vh(x):
        return jnp.dot(x, wt_bf, preferred_element_type=jnp.float32) + hb

    def hv(h):
        return jnp.dot(h, w_bf, preferred_element_type=jnp.float32) + vb

    v0 = prep["v_p"].astype(jnp.bfloat16)
    h_ = sample(vh(v0), hn[0])
    v_ = v0
    for step in range(k):
        v_ = sample(hv(h_), vn[step])
        h_ = sample(vh(v_), hn[step + 1])
    return v_.astype(jnp.float32)


if __name__ == "__main__":
    # Small, deliberately non-aligned sizes to exercise the padding path.
    B, n_vis, n_hid, k = 6, 120, 40, 2

    key = jax.random.PRNGKey(0)
    k_w, k_v, k_noise = jax.random.split(key, 3)

    # Parameter init mirroring the module's __init__:
    #   W = randn(n_hid, n_vis) * 0.01 ; v_bias = zeros ; h_bias = zeros
    W = 0.01 * jax.random.normal(k_w, (n_hid, n_vis), dtype=jnp.float32)
    v_bias = jnp.zeros((n_vis,), dtype=jnp.float32)
    h_bias = jnp.zeros((n_hid,), dtype=jnp.float32)

    # Binary visible input (like binarized MNIST pixels).
    v = (jax.random.uniform(k_v, (B, n_vis)) > 0.5).astype(jnp.float32)

    v_in, v_sampled = rbm_forward(v, W, v_bias, h_bias, k=k, key=k_noise)
    jax.block_until_ready(v_sampled)

    assert v_in.shape == (B, n_vis)
    assert v_sampled.shape == (B, n_vis)
    # Samples must be exactly {0, 1} (relu(sign(.)) semantics).
    assert bool(jnp.all((v_sampled == 0.0) | (v_sampled == 1.0)))

    # Deterministic-given-noise reference (same padded inputs, same noise).
    prep = _prepare(v, W, v_bias, h_bias, k, k_noise, 256)
    v_ref = _reference(prep, k)[:B, :n_vis]
    agreement = float(jnp.mean((v_sampled == v_ref).astype(jnp.float32)))
    # Allow a tiny slack for logits landing within rounding distance of noise.
    assert agreement >= 0.97, f"kernel/reference agreement too low: {agreement}"

    print("KERNEL_OK")
</pallas_src>

<mosaic_0001>
module attributes {stable_mosaic.version = 11 : i64} {
  func.func @_rbm_kernel(%arg0: i32, %arg1: memref<8x128xf32, #tpu.memory_space<vmem>>, %arg2: memref<128x128xbf16, #tpu.memory_space<vmem>>, %arg3: memref<128x128xbf16, #tpu.memory_space<vmem>>, %arg4: memref<1x128xf32, #tpu.memory_space<vmem>>, %arg5: memref<1x128xf32, #tpu.memory_space<vmem>>, %arg6: memref<3x8x128xf32, #tpu.memory_space<vmem>>, %arg7: memref<2x8x128xf32, #tpu.memory_space<vmem>>, %arg8: memref<8x128xf32, #tpu.memory_space<vmem>>) attributes {dimension_semantics = [#tpu.dimension_semantics<parallel>], iteration_bounds = array<i64: 1>, scalar_prefetch = 0 : i64, scratch_operands = 0 : i64, tpu.core_type = #tpu.core_type<tc>, window_params = [{transform_indices = @transform_0, window_bounds = array<i64: 8, 128>}, {pipeline_mode = #tpu.pipeline_mode<synchronous>, transform_indices = @transform_1, window_bounds = array<i64: 128, 128>}, {pipeline_mode = #tpu.pipeline_mode<synchronous>, transform_indices = @transform_2, window_bounds = array<i64: 128, 128>}, {pipeline_mode = #tpu.pipeline_mode<synchronous>, transform_indices = @transform_3, window_bounds = array<i64: 1, 128>}, {pipeline_mode = #tpu.pipeline_mode<synchronous>, transform_indices = @transform_4, window_bounds = array<i64: 1, 128>}, {transform_indices = @transform_5, window_bounds = array<i64: 3, 8, 128>}, {transform_indices = @transform_6, window_bounds = array<i64: 2, 8, 128>}, {transform_indices = @transform_7, window_bounds = array<i64: 8, 128>}]} {
    %c0 = arith.constant 0 : index
    %c0_0 = arith.constant 0 : index
    %0 = vector.load %arg2[%c0, %c0_0] : memref<128x128xbf16, #tpu.memory_space<vmem>>, vector<128x128xbf16>
    %c0_1 = arith.constant 0 : index
    %c0_2 = arith.constant 0 : index
    %1 = vector.load %arg3[%c0_1, %c0_2] : memref<128x128xbf16, #tpu.memory_space<vmem>>, vector<128x128xbf16>
    %c0_3 = arith.constant 0 : index
    %c0_4 = arith.constant 0 : index
    %2 = vector.load %arg4[%c0_3, %c0_4] : memref<1x128xf32, #tpu.memory_space<vmem>>, vector<1x128xf32>
    %c0_5 = arith.constant 0 : index
    %c0_6 = arith.constant 0 : index
    %3 = vector.load %arg5[%c0_5, %c0_6] : memref<1x128xf32, #tpu.memory_space<vmem>>, vector<1x128xf32>
    %c0_7 = arith.constant 0 : index
    %c0_8 = arith.constant 0 : index
    %4 = vector.load %arg1[%c0_7, %c0_8] : memref<8x128xf32, #tpu.memory_space<vmem>>, vector<8x128xf32>
    %5 = arith.truncf %4 : vector<8x128xf32> to vector<8x128xbf16>
    %cst = arith.constant dense<0.000000e+00> : vector<8x128xf32>
    %6 = tpu.matmul %5, %1, %cst {dimension_numbers = #tpu.dot_dimension_numbers<[1], [0], [0], [1], [0, 0, 1, 1], [], []>} : vector<8x128xbf16>, vector<128x128xbf16>, vector<8x128xf32> -> vector<8x128xf32>
    %7 = vector.broadcast %2 : vector<1x128xf32> to vector<8x128xf32>
    %8 = arith.addf %6, %7 : vector<8x128xf32>
    %c0_9 = arith.constant 0 : index
    %c0_10 = arith.constant 0 : index
    %c0_11 = arith.constant 0 : index
    %9 = vector.load %arg6[%c0_9, %c0_10, %c0_11] : memref<3x8x128xf32, #tpu.memory_space<vmem>>, vector<1x8x128xf32>
    %10 = vector.shape_cast %9 : vector<1x8x128xf32> to vector<8x128xf32>
    %11 = arith.cmpf ogt, %8, %10 : vector<8x128xf32>
    %cst_12 = arith.constant 1.000000e+00 : f32
    %cst_13 = arith.constant 0.000000e+00 : f32
    %12 = vector.broadcast %cst_12 : f32 to vector<8x128xf32>
    %13 = vector.broadcast %cst_13 : f32 to vector<8x128xf32>
    %14 = arith.select %11, %12, %13 : vector<8x128xi1>, vector<8x128xf32>
    %15 = arith.truncf %14 : vector<8x128xf32> to vector<8x128xbf16>
    %cst_14 = arith.constant dense<0.000000e+00> : vector<8x128xf32>
    %16 = tpu.matmul %15, %0, %cst_14 {dimension_numbers = #tpu.dot_dimension_numbers<[1], [0], [0], [1], [0, 0, 1, 1], [], []>} : vector<8x128xbf16>, vector<128x128xbf16>, vector<8x128xf32> -> vector<8x128xf32>
    %17 = vector.broadcast %3 : vector<1x128xf32> to vector<8x128xf32>
    %18 = arith.addf %16, %17 : vector<8x128xf32>
    %c0_15 = arith.constant 0 : index
    %c0_16 = arith.constant 0 : index
    %c0_17 = arith.constant 0 : index
    %19 = vector.load %arg7[%c0_15, %c0_16, %c0_17] : memref<2x8x128xf32, #tpu.memory_space<vmem>>, vector<1x8x128xf32>
    %20 = vector.shape_cast %19 : vector<1x8x128xf32> to vector<8x128xf32>
    %21 = arith.cmpf ogt, %18, %20 : vector<8x128xf32>
    %cst_18 = arith.constant 1.000000e+00 : f32
    %cst_19 = arith.constant 0.000000e+00 : f32
    %22 = vector.broadcast %cst_18 : f32 to vector<8x128xf32>
    %23 = vector.broadcast %cst_19 : f32 to vector<8x128xf32>
    %24 = arith.select %21, %22, %23 : vector<8x128xi1>, vector<8x128xf32>
    %25 = arith.truncf %24 : vector<8x128xf32> to vector<8x128xbf16>
    %cst_20 = arith.constant dense<0.000000e+00> : vector<8x128xf32>
    %26 = tpu.matmul %25, %1, %cst_20 {dimension_numbers = #tpu.dot_dimension_numbers<[1], [0], [0], [1], [0, 0, 1, 1], [], []>} : vector<8x128xbf16>, vector<128x128xbf16>, vector<8x128xf32> -> vector<8x128xf32>
    %27 = vector.broadcast %2 : vector<1x128xf32> to vector<8x128xf32>
    %28 = arith.addf %26, %27 : vector<8x128xf32>
    %c1 = arith.constant 1 : index
    %c0_21 = arith.constant 0 : index
    %c0_22 = arith.constant 0 : index
    %29 = vector.load %arg6[%c1, %c0_21, %c0_22] : memref<3x8x128xf32, #tpu.memory_space<vmem>>, vector<1x8x128xf32>
    %30 = vector.shape_cast %29 : vector<1x8x128xf32> to vector<8x128xf32>
    %31 = arith.cmpf ogt, %28, %30 : vector<8x128xf32>
    %cst_23 = arith.constant 1.000000e+00 : f32
    %cst_24 = arith.constant 0.000000e+00 : f32
    %32 = vector.broadcast %cst_23 : f32 to vector<8x128xf32>
    %33 = vector.broadcast %cst_24 : f32 to vector<8x128xf32>
    %34 = arith.select %31, %32, %33 : vector<8x128xi1>, vector<8x128xf32>
    %35 = arith.truncf %34 : vector<8x128xf32> to vector<8x128xbf16>
    %cst_25 = arith.constant dense<0.000000e+00> : vector<8x128xf32>
    %36 = tpu.matmul %35, %0, %cst_25 {dimension_numbers = #tpu.dot_dimension_numbers<[1], [0], [0], [1], [0, 0, 1, 1], [], []>} : vector<8x128xbf16>, vector<128x128xbf16>, vector<8x128xf32> -> vector<8x128xf32>
    %37 = vector.broadcast %3 : vector<1x128xf32> to vector<8x128xf32>
    %38 = arith.addf %36, %37 : vector<8x128xf32>
    %c1_26 = arith.constant 1 : index
    %c0_27 = arith.constant 0 : index
    %c0_28 = arith.constant 0 : index
    %39 = vector.load %arg7[%c1_26, %c0_27, %c0_28] : memref<2x8x128xf32, #tpu.memory_space<vmem>>, vector<1x8x128xf32>
    %40 = vector.shape_cast %39 : vector<1x8x128xf32> to vector<8x128xf32>
    %41 = arith.cmpf ogt, %38, %40 : vector<8x128xf32>
    %cst_29 = arith.constant 1.000000e+00 : f32
    %cst_30 = arith.constant 0.000000e+00 : f32
    %42 = vector.broadcast %cst_29 : f32 to vector<8x128xf32>
    %43 = vector.broadcast %cst_30 : f32 to vector<8x128xf32>
    %44 = arith.select %41, %42, %43 : vector<8x128xi1>, vector<8x128xf32>
    %45 = arith.truncf %44 : vector<8x128xf32> to vector<8x128xbf16>
    %46 = arith.extf %45 : vector<8x128xbf16> to vector<8x128xf32>
    %c0_31 = arith.constant 0 : index
    %c0_32 = arith.constant 0 : index
    %47 = vector.load %arg8[%c0_31, %c0_32] : memref<8x128xf32, #tpu.memory_space<vmem>>, vector<8x128xf32>
    tpu.vector_store %arg8[%c0_31, %c0_32], %46 {strides = array<i32>} : memref<8x128xf32, #tpu.memory_space<vmem>>, vector<8x128xf32>,
    return
  }
  func.func @transform_0(%arg0: i32) -> (i32, i32) {
    %c0_i32 = arith.constant 0 : i32
    %c0_i32_0 = arith.constant 0 : i32
    return %arg0, %c0_i32 : i32, i32
  }
  func.func @transform_1(%arg0: i32) -> (i32, i32) {
    %c0_i32 = arith.constant 0 : i32
    %c0_i32_0 = arith.constant 0 : i32
    %c0_i32_1 = arith.constant 0 : i32
    return %c0_i32, %c0_i32_0 : i32, i32
  }
  func.func @transform_2(%arg0: i32) -> (i32, i32) {
    %c0_i32 = arith.constant 0 : i32
    %c0_i32_0 = arith.constant 0 : i32
    %c0_i32_1 = arith.constant 0 : i32
    return %c0_i32, %c0_i32_0 : i32, i32
  }
  func.func @transform_3(%arg0: i32) -> (i32, i32) {
    %c0_i32 = arith.constant 0 : i32
    %c0_i32_0 = arith.constant 0 : i32
    %c0_i32_1 = arith.constant 0 : i32
    return %c0_i32, %c0_i32_0 : i32, i32
  }
  func.func @transform_4(%arg0: i32) -> (i32, i32) {
    %c0_i32 = arith.constant 0 : i32
    %c0_i32_0 = arith.constant 0 : i32
    %c0_i32_1 = arith.constant 0 : i32
    return %c0_i32, %c0_i32_0 : i32, i32
  }
  func.func @transform_5(%arg0: i32) -> (i32, i32, i32) {
    %c0_i32 = arith.constant 0 : i32
    %c0_i32_0 = arith.constant 0 : i32
    %c0_i32_1 = arith.constant 0 : i32
    return %c0_i32, %arg0, %c0_i32_0 : i32, i32, i32
  }
  func.func @transform_6(%arg0: i32) -> (i32, i32, i32) {
    %c0_i32 = arith.constant 0 : i32
    %c0_i32_0 = arith.constant 0 : i32
    %c0_i32_1 = arith.constant 0 : i32
    return %c0_i32, %arg0, %c0_i32_0 : i32, i32, i32
  }
  func.func @transform_7(%arg0: i32) -> (i32, i32) {
    %c0_i32 = arith.constant 0 : i32
    %c0_i32_0 = arith.constant 0 : i32
    return %arg0, %c0_i32 : i32, i32
  }
}

</mosaic_0001>

<llo_original>
// kernel: tpu_custom_call.1
$region0: #{tpu_custom_call.1}
  #allocation0 [shape = 'u32[]', space=smem, size = 0x4, offset = 0x4, fixed_abs, tag = 'smem constant byte address 0x4 - core index']
  #allocation1 [shape = 'u32[144,128]{1,0:T(1,128)}', space=vmem, size = 0x12000, scoped, tag = 'internal scratch']
  %s0 = inlined_call_operand.hbm [shape: f32[8,128], index: 0, kind: input, shape index: {}]
  %s1 = inlined_call_operand.hbm [shape: bf16[128,128], index: 1, kind: input, shape index: {}]
  %s2 = inlined_call_operand.hbm [shape: bf16[128,128], index: 2, kind: input, shape index: {}]
  %s3 = inlined_call_operand.vmem [shape: f32[1,128], index: 3, kind: input, shape index: {}]
  %s4 = inlined_call_operand.vmem [shape: f32[1,128], index: 4, kind: input, shape index: {}]
  %s5 = inlined_call_operand.hbm [shape: f32[3,8,128], index: 5, kind: input, shape index: {}]
  %s6 = inlined_call_operand.hbm [shape: f32[2,8,128], index: 6, kind: input, shape index: {}]
  %s7 = inlined_call_operand.hbm [shape: f32[8,128], index: 7, kind: output, shape index: {}]
  %s8 = sld [smem:[#allocation0]]
  $region58: #{tpu_custom_call.1} parent=0
    _
  %s10 = ssub.s32 1, %s8
  %s11 = scalar_select 0, %s10, %s8
  $region1: #{tpu_custom_call.1} parent=0
    #allocation2 [shape = 'u8[4096]{0}', space=vmem, size = 0x1000, scoped, tag = 'input window, operand 0, single buffered']
    #allocation3 [shape = 's32[1]{0}', space=sflag, size = 0x4, scoped, tag = 'scoped memory for tpu_custom_call.1']
    #allocation4 [shape = 's32[1]{0}', space=sflag, size = 0x4, scoped, tag = 'scoped memory for tpu_custom_call.1']
    #allocation5 [shape = 'u8[32768]{0}', space=vmem, size = 0x8000, scoped, tag = 'input window, operand 1, single buffered']
    #allocation6 [shape = 's32[1]{0}', space=sflag, size = 0x4, scoped, tag = 'scoped memory for tpu_custom_call.1']
    #allocation7 [shape = 'u8[32768]{0}', space=vmem, size = 0x8000, scoped, tag = 'input window, operand 2, single buffered']
    #allocation8 [shape = 'u8[12288]{0}', space=vmem, size = 0x3000, scoped, tag = 'input window, operand 5, single buffered']
    #allocation9 [shape = 's32[1]{0}', space=sflag, size = 0x4, scoped, tag = 'scoped memory for tpu_custom_call.1']
    #allocation10 [shape = 'u8[8192]{0}', space=vmem, size = 0x2000, scoped, tag = 'input window, operand 6, single buffered']
    #allocation11 [shape = 'u8[4096]{0}', space=vmem, size = 0x1000, scoped, tag = 'output window, operand 0, single buffered']
    %12 = vsyncpa [#allocation3], 0
    %13 = vsyncpa [#allocation6], 0
    %14 = vsyncpa [#allocation9], 0
    %15 = vsyncpa [#allocation4], 0
    // Predicated region
    $region2: #{tpu_custom_call.1} parent=1 // pred_check
      _
    $region3: #{tpu_custom_call.1} parent=1 // pred_check_branch
      %17 = sbr.rel (0) target = $region5
    $region4: #{tpu_custom_call.1} parent=1 // pred_region
      %s19 = ssub.s32 128, 128
      %20 = vsyncadd [#allocation3], %s19
      %s22 = sshll.u32 [#allocation2], 4
      %s23 = int_to_ptr.vmem [resolvable:$true] %s22
      %25 = dma.hbm_to_vmem [thread:$0]  %s0, 128, %s23, [#allocation3]
    $region5: #{tpu_custom_call.1} parent=1 // pred_fallthru
      _
    // Predicated region
    $region6: #{tpu_custom_call.1} parent=1 // pred_check
      _
    $region7: #{tpu_custom_call.1} parent=1 // pred_check_branch
      %27 = sbr.rel (0) target = $region9
    $region8: #{tpu_custom_call.1} parent=1 // pred_region
      %s29 = ssub.s32 1024, 1024
      %30 = vsyncadd [#allocation6], %s29
      %s31 = sshll.u32 [#allocation5], 4
      %s32 = int_to_ptr.vmem [resolvable:$true] %s31
      %37 = dma.hbm_to_vmem [thread:$0]  %s1, 1024, %s32, [#allocation6], 64, 64, 4
    $region9: #{tpu_custom_call.1} parent=1 // pred_fallthru
      _
    // Predicated region
    $region10: #{tpu_custom_call.1} parent=1 // pred_check
      _
    $region11: #{tpu_custom_call.1} parent=1 // pred_check_branch
      %39 = sbr.rel (0) target = $region13
    $region12: #{tpu_custom_call.1} parent=1 // pred_region
      %s41 = ssub.s32 1024, 1024
      %42 = vsyncadd [#allocation6], %s41
      %s43 = sshll.u32 [#allocation7], 4
      %s44 = int_to_ptr.vmem [resolvable:$true] %s43
      %49 = dma.hbm_to_vmem [thread:$0]  %s2, 1024, %s44, [#allocation6], 64, 64, 4
    $region13: #{tpu_custom_call.1} parent=1 // pred_fallthru
      _
    // Predicated region
    $region14: #{tpu_custom_call.1} parent=1 // pred_check
      _
    $region15: #{tpu_custom_call.1} parent=1 // pred_check_branch
      %51 = sbr.rel (0) target = $region17
    $region16: #{tpu_custom_call.1} parent=1 // pred_region
      _
    $region17: #{tpu_custom_call.1} parent=1 // pred_fallthru
      _
    // Predicated region
    $region18: #{tpu_custom_call.1} parent=1 // pred_check
      _
    $region19: #{tpu_custom_call.1} parent=1 // pred_check_branch
      %53 = sbr.rel (0) target = $region21
    $region20: #{tpu_custom_call.1} parent=1 // pred_region
      _
    $region21: #{tpu_custom_call.1} parent=1 // pred_fallthru
      _
    // Predicated region
    $region22: #{tpu_custom_call.1} parent=1 // pred_check
      _
    $region23: #{tpu_custom_call.1} parent=1 // pred_check_branch
      %55 = sbr.rel (0) target = $region25
    $region24: #{tpu_custom_call.1} parent=1 // pred_region
      %s57 = ssub.s32 384, 384
      %58 = vsyncadd [#allocation9], %s57
      %s59 = sshll.u32 [#allocation8], 4
      %s60 = int_to_ptr.vmem [resolvable:$true] %s59
      %65 = dma.hbm_to_vmem [thread:$0]  %s5, 384, %s60, [#allocation9], 128, 128, 8
    $region25: #{tpu_custom_call.1} parent=1 // pred_fallthru
      _
    // Predicated region
    $region26: #{tpu_custom_call.1} parent=1 // pred_check
      _
    $region27: #{tpu_custom_call.1} parent=1 // pred_check_branch
      %67 = sbr.rel (0) target = $region29
    $region28: #{tpu_custom_call.1} parent=1 // pred_region
      %s69 = ssub.s32 256, 256
      %70 = vsyncadd [#allocation9], %s69
      %s71 = sshll.u32 [#allocation10], 4
      %s72 = int_to_ptr.vmem [resolvable:$true] %s71
      %77 = dma.hbm_to_vmem [thread:$0]  %s6, 256, %s72, [#allocation9], 128, 128, 8
    $region29: #{tpu_custom_call.1} parent=1 // pred_fallthru
      _
    // Predicated region
    $region30: #{tpu_custom_call.1} parent=1 // pred_check
      _
    $region31: #{tpu_custom_call.1} parent=1 // pred_check_branch
      %79 = sbr.rel (0) target = $region33
    $region32: #{tpu_custom_call.1} parent=1 // pred_region
      %80 = dma.done [#allocation3], 128
    $region33: #{tpu_custom_call.1} parent=1 // pred_fallthru
      _
    // Predicated region
    $region34: #{tpu_custom_call.1} parent=1 // pred_check
      _
    $region35: #{tpu_custom_call.1} parent=1 // pred_check_branch
      %82 = sbr.rel (0) target = $region37
    $region36: #{tpu_custom_call.1} parent=1 // pred_region
      %83 = dma.done [#allocation6], 1024
    $region37: #{tpu_custom_call.1} parent=1 // pred_fallthru
      _
    // Predicated region
    $region38: #{tpu_custom_call.1} parent=1 // pred_check
      _
    $region39: #{tpu_custom_call.1} parent=1 // pred_check_branch
      %85 = sbr.rel (0) target = $region41
    $region40: #{tpu_custom_call.1} parent=1 // pred_region
      %86 = dma.done [#allocation6], 1024
    $region41: #{tpu_custom_call.1} parent=1 // pred_fallthru
      _
    // Predicated region
    $region42: #{tpu_custom_call.1} parent=1 // pred_check
      _
    $region43: #{tpu_custom_call.1} parent=1 // pred_check_branch
      %88 = sbr.rel (0) target = $region45
    $region44: #{tpu_custom_call.1} parent=1 // pred_region
      %89 = dma.done [#allocation9], 384
    $region45: #{tpu_custom_call.1} parent=1 // pred_fallthru
      _
    // Predicated region
    $region46: #{tpu_custom_call.1} parent=1 // pred_check
      _
    $region47: #{tpu_custom_call.1} parent=1 // pred_check_branch
      %91 = sbr.rel (0) target = $region49
    $region48: #{tpu_custom_call.1} parent=1 // pred_region
      %92 = dma.done [#allocation9], 256
    $region49: #{tpu_custom_call.1} parent=1 // pred_fallthru
      _
    %v94 = vld [vmem:[#allocation5] sm:$0xf]
    %v95 = vld [vmem:[#allocation5 + $0x4] sm:$0xf]
    %v96 = vld [vmem:[#allocation5 + $0x8] sm:$0xf]
    %v97 = vld [vmem:[#allocation5 + $0xc] sm:$0xf]
    %v98 = vld [vmem:[#allocation5 + $0x10] sm:$0xf]
    %v99 = vld [vmem:[#allocation5 + $0x14] sm:$0xf]
    %v100 = vld [vmem:[#allocation5 + $0x18] sm:$0xf]
    %v101 = vld [vmem:[#allocation5 + $0x1c] sm:$0xf]
    %v102 = vld [vmem:[#allocation5 + $0x20] sm:$0xf]
    %v103 = vld [vmem:[#allocation5 + $0x24] sm:$0xf]
    %v104 = vld [vmem:[#allocation5 + $0x28] sm:$0xf]
    %v105 = vld [vmem:[#allocation5 + $0x2c] sm:$0xf]
    %v106 = vld [vmem:[#allocation5 + $0x30] sm:$0xf]
    %v107 = vld [vmem:[#allocation5 + $0x34] sm:$0xf]
    %v108 = vld [vmem:[#allocation5 + $0x38] sm:$0xf]
    %v109 = vld [vmem:[#allocation5 + $0x3c] sm:$0xf]
    %v110 = vld [vmem:[#allocation7] sm:$0xf]
    %v111 = vld [vmem:[#allocation7 + $0x4] sm:$0xf]
    %v112 = vld [vmem:[#allocation7 + $0x8] sm:$0xf]
    %v113 = vld [vmem:[#allocation7 + $0xc] sm:$0xf]
    %v114 = vld [vmem:[#allocation7 + $0x10] sm:$0xf]
    %v115 = vld [vmem:[#allocation7 + $0x14] sm:$0xf]
    %v116 = vld [vmem:[#allocation7 + $0x18] sm:$0xf]
    %v117 = vld [vmem:[#allocation7 + $0x1c] sm:$0xf]
    %v118 = vld [vmem:[#allocation7 + $0x20] sm:$0xf]
    %v119 = vld [vmem:[#allocation7 + $0x24] sm:$0xf]
    %v120 = vld [vmem:[#allocation7 + $0x28] sm:$0xf]
    %v121 = vld [vmem:[#allocation7 + $0x2c] sm:$0xf]
    %v122 = vld [vmem:[#allocation7 + $0x30] sm:$0xf]
    %v123 = vld [vmem:[#allocation7 + $0x34] sm:$0xf]
    %v124 = vld [vmem:[#allocation7 + $0x38] sm:$0xf]
    %v125 = vld [vmem:[#allocation7 + $0x3c] sm:$0xf]
    %v126 = vld [vmem:[%s3] sm:$0x1]
    %v127 = vld [vmem:[%s4] sm:$0x1]
    %v128 = vld [vmem:[#allocation2] sm:$0xff]
    %v129 = vpack.c.bf16 %v128, %v128
    %v131 = vlaneseq
    %v132 = vshrl.u32 %v131, 7
    %v133 = vsub.s32 0, %v132
    %v134 = vrot.slane %v126, %v133
    %v152 = vunpack.c.l.b16 %v110
    %v153 = vunpack.c.l.b16 %v111
    %v154 = vunpack.c.l.b16 %v112
    %v155 = vunpack.c.l.b16 %v113
    %v156 = vunpack.c.l.b16 %v114
    %v157 = vunpack.c.l.b16 %v115
    %v158 = vunpack.c.l.b16 %v116
    %v159 = vunpack.c.l.b16 %v117
    %v160 = vunpack.c.l.b16 %v118
    %v161 = vunpack.c.l.b16 %v119
    %v162 = vunpack.c.l.b16 %v120
    %v163 = vunpack.c.l.b16 %v121
    %v164 = vunpack.c.l.b16 %v122
    %v165 = vunpack.c.l.b16 %v123
    %v166 = vunpack.c.l.b16 %v124
    %v167 = vunpack.c.l.b16 %v125
    %v168 = vpack.c.b16 %v153, %v152
    %v169 = vpack.c.b16 %v155, %v154
    %v170 = vpack.c.b16 %v157, %v156
    %v171 = vpack.c.b16 %v159, %v158
    %v172 = vpack.c.b16 %v161, %v160
    %v173 = vpack.c.b16 %v163, %v162
    %v174 = vpack.c.b16 %v165, %v164
    %v175 = vpack.c.b16 %v167, %v166
    %184 = vmatprep.subr.bf16.mxu0 0
    %185 = vmatpush1.bf16.msra.mxu0 %v175
    %186 = vmatprep.subr.bf16.mxu0 0
    %187 = vmatpush1.bf16.msra.mxu0 %v174
    %188 = vmatprep.subr.bf16.mxu0 0
    %189 = vmatpush1.bf16.msra.mxu0 %v173
    %190 = vmatprep.subr.bf16.mxu0 0
    %191 = vmatpush1.bf16.msra.mxu0 %v172
    %192 = vmatprep.subr.bf16.mxu0 0
    %193 = vmatpush1.bf16.msra.mxu0 %v171
    %194 = vmatprep.subr.bf16.mxu0 0
    %195 = vmatpush1.bf16.msra.mxu0 %v170
    %196 = vmatprep.subr.bf16.mxu0 0
    %197 = vmatpush1.bf16.msra.mxu0 %v169
    %198 = vmatprep.subr.bf16.mxu0 0
    %199 = vmatpush1.bf16.msra.mxu0 %v168
    %200 = vmatprep.subr.bf16.mxu0 0
    %201 = vmatpush2.bf16.msra.mxu0 0
    %202 = vmatprep.subr.bf16.mxu0 0
    %203 = vmatpush2.bf16.msra.mxu0 0
    %204 = vmatprep.subr.bf16.mxu0 0
    %205 = vmatpush2.bf16.msra.mxu0 0
    %206 = vmatprep.subr.bf16.mxu0 0
    %207 = vmatpush2.bf16.msra.mxu0 0
    %208 = vmatprep.subr.bf16.mxu0 0
    %209 = vmatpush2.bf16.msra.mxu0 0
    %210 = vmatprep.subr.bf16.mxu0 0
    %211 = vmatpush2.bf16.msra.mxu0 0
    %212 = vmatprep.subr.bf16.mxu0 0
    %213 = vmatpush2.bf16.msra.mxu0 0
    %214 = vmatprep.subr.bf16.mxu0 0
    %215 = vmatpush2.bf16.msra.mxu0 0
    %216 = vmatprep.mubr.bf16.mxu0 0
    %217 = vmatmul.mubr.bf16.gmra.mxu0 %v129
    %v218 = vpop.f32.mrf.mxu0
    %v219 = vadd.f32 %v134, %v218
    %v220 = vpop.f32.mrf.mxu0
    %v221 = vpop.f32.mrf.mxu0
    %v222 = vpop.f32.mrf.mxu0
    %223 = vdwg.mxu0
    %v224 = vld [vmem:[#allocation8] sm:$0xff]
    %vm225 = vcmp.gt.f32.partialorder %v219, %v224
    %v226 = vsel %vm225, 1.0, 0.0
    %v227 = vpack.c.bf16 %v226, %v226
    %v229 = vlaneseq
    %v230 = vshrl.u32 %v229, 7
    %v231 = vsub.s32 0, %v230
    %v232 = vrot.slane %v127, %v231
    %v250 = vunpack.c.l.b16 %v94
    %v251 = vunpack.c.l.b16 %v95
    %v252 = vunpack.c.l.b16 %v96
    %v253 = vunpack.c.l.b16 %v97
    %v254 = vunpack.c.l.b16 %v98
    %v255 = vunpack.c.l.b16 %v99
    %v256 = vunpack.c.l.b16 %v100
    %v257 = vunpack.c.l.b16 %v101
    %v258 = vunpack.c.l.b16 %v102
    %v259 = vunpack.c.l.b16 %v103
    %v260 = vunpack.c.l.b16 %v104
    %v261 = vunpack.c.l.b16 %v105
    %v262 = vunpack.c.l.b16 %v106
    %v263 = vunpack.c.l.b16 %v107
    %v264 = vunpack.c.l.b16 %v108
    %v265 = vunpack.c.l.b16 %v109
    %v266 = vpack.c.b16 %v251, %v250
    %v267 = vpack.c.b16 %v253, %v252
    %v268 = vpack.c.b16 %v255, %v254
    %v269 = vpack.c.b16 %v257, %v256
    %v270 = vpack.c.b16 %v259, %v258
    %v271 = vpack.c.b16 %v261, %v260
    %v272 = vpack.c.b16 %v263, %v262
    %v273 = vpack.c.b16 %v265, %v264
    %282 = vmatprep.subr.bf16.mxu0 0
    %283 = vmatpush1.bf16.msra.mxu0 %v273
    %284 = vmatprep.subr.bf16.mxu0 0
    %285 = vmatpush1.bf16.msra.mxu0 %v272
    %286 = vmatprep.subr.bf16.mxu0 0
    %287 = vmatpush1.bf16.msra.mxu0 %v271
    %288 = vmatprep.subr.bf16.mxu0 0
    %289 = vmatpush1.bf16.msra.mxu0 %v270
    %290 = vmatprep.subr.bf16.mxu0 0
    %291 = vmatpush1.bf16.msra.mxu0 %v269
    %292 = vmatprep.subr.bf16.mxu0 0
    %293 = vmatpush1.bf16.msra.mxu0 %v268
    %294 = vmatprep.subr.bf16.mxu0 0
    %295 = vmatpush1.bf16.msra.mxu0 %v267
    %296 = vmatprep.subr.bf16.mxu0 0
    %297 = vmatpush1.bf16.msra.mxu0 %v266
    %298 = vmatprep.subr.bf16.mxu0 0
    %299 = vmatpush2.bf16.msra.mxu0 0
    %300 = vmatprep.subr.bf16.mxu0 0
    %301 = vmatpush2.bf16.msra.mxu0 0
    %302 = vmatprep.subr.bf16.mxu0 0
    %303 = vmatpush2.bf16.msra.mxu0 0
    %304 = vmatprep.subr.bf16.mxu0 0
    %305 = vmatpush2.bf16.msra.mxu0 0
    %306 = vmatprep.subr.bf16.mxu0 0
    %307 = vmatpush2.bf16.msra.mxu0 0
    %308 = vmatprep.subr.bf16.mxu0 0
    %309 = vmatpush2.bf16.msra.mxu0 0
    %310 = vmatprep.subr.bf16.mxu0 0
    %311 = vmatpush2.bf16.msra.mxu0 0
    %312 = vmatprep.subr.bf16.mxu0 0
    %313 = vmatpush2.bf16.msra.mxu0 0
    %314 = vmatprep.mubr.bf16.mxu0 0
    %315 = vmatmul.mubr.bf16.gmra.mxu0 %v227
    %v316 = vpop.f32.mrf.mxu0
    %v317 = vadd.f32 %v232, %v316
    %v318 = vpop.f32.mrf.mxu0
    %v319 = vpop.f32.mrf.mxu0
    %v320 = vpop.f32.mrf.mxu0
    %321 = vdwg.mxu0
    %v322 = vld [vmem:[#allocation10] sm:$0xff]
    %vm323 = vcmp.gt.f32.partialorder %v317, %v322
    %v324 = vsel %vm323, 1.0, 0.0
    %v325 = vpack.c.bf16 %v324, %v324
    %326 = vmatprep.subr.bf16.mxu0 0
    %327 = vmatpush1.bf16.msra.mxu0 %v175
    %328 = vmatprep.subr.bf16.mxu0 0
    %329 = vmatpush1.bf16.msra.mxu0 %v174
    %330 = vmatprep.subr.bf16.mxu0 0
    %331 = vmatpush1.bf16.msra.mxu0 %v173
    %332 = vmatprep.subr.bf16.mxu0 0
    %333 = vmatpush1.bf16.msra.mxu0 %v172
    %334 = vmatprep.subr.bf16.mxu0 0
    %335 = vmatpush1.bf16.msra.mxu0 %v171
    %336 = vmatprep.subr.bf16.mxu0 0
    %337 = vmatpush1.bf16.msra.mxu0 %v170
    %338 = vmatprep.subr.bf16.mxu0 0
    %339 = vmatpush1.bf16.msra.mxu0 %v169
    %340 = vmatprep.subr.bf16.mxu0 0
    %341 = vmatpush1.bf16.msra.mxu0 %v168
    %342 = vmatprep.subr.bf16.mxu0 0
    %343 = vmatpush2.bf16.msra.mxu0 0
    %344 = vmatprep.subr.bf16.mxu0 0
    %345 = vmatpush2.bf16.msra.mxu0 0
    %346 = vmatprep.subr.bf16.mxu0 0
    %347 = vmatpush2.bf16.msra.mxu0 0
    %348 = vmatprep.subr.bf16.mxu0 0
    %349 = vmatpush2.bf16.msra.mxu0 0
    %350 = vmatprep.subr.bf16.mxu0 0
    %351 = vmatpush2.bf16.msra.mxu0 0
    %352 = vmatprep.subr.bf16.mxu0 0
    %353 = vmatpush2.bf16.msra.mxu0 0
    %354 = vmatprep.subr.bf16.mxu0 0
    %355 = vmatpush2.bf16.msra.mxu0 0
    %356 = vmatprep.subr.bf16.mxu0 0
    %357 = vmatpush2.bf16.msra.mxu0 0
    %358 = vmatprep.mubr.bf16.mxu0 0
    %359 = vmatmul.mubr.bf16.gmra.mxu0 %v325
    %v360 = vpop.f32.mrf.mxu0
    %v361 = vadd.f32 %v134, %v360
    %v362 = vpop.f32.mrf.mxu0
    %v363 = vpop.f32.mrf.mxu0
    %v364 = vpop.f32.mrf.mxu0
    %365 = vdwg.mxu0
    %s366 = scalar_lea.vmem [#allocation8], 8
    %v367 = vld [vmem:[%s366] sm:$0xff]
    %vm368 = vcmp.gt.f32.partialorder %v361, %v367
    %v369 = vsel %vm368, 1.0, 0.0
    %v370 = vpack.c.bf16 %v369, %v369
    %371 = vmatprep.subr.bf16.mxu0 0
    %372 = vmatpush1.bf16.msra.mxu0 %v273
    %373 = vmatprep.subr.bf16.mxu0 0
    %374 = vmatpush1.bf16.msra.mxu0 %v272
    %375 = vmatprep.subr.bf16.mxu0 0
    %376 = vmatpush1.bf16.msra.mxu0 %v271
    %377 = vmatprep.subr.bf16.mxu0 0
    %378 = vmatpush1.bf16.msra.mxu0 %v270
    %379 = vmatprep.subr.bf16.mxu0 0
    %380 = vmatpush1.bf16.msra.mxu0 %v269
    %381 = vmatprep.subr.bf16.mxu0 0
    %382 = vmatpush1.bf16.msra.mxu0 %v268
    %383 = vmatprep.subr.bf16.mxu0 0
    %384 = vmatpush1.bf16.msra.mxu0 %v267
    %385 = vmatprep.subr.bf16.mxu0 0
    %386 = vmatpush1.bf16.msra.mxu0 %v266
    %387 = vmatprep.subr.bf16.mxu0 0
    %388 = vmatpush2.bf16.msra.mxu0 0
    %389 = vmatprep.subr.bf16.mxu0 0
    %390 = vmatpush2.bf16.msra.mxu0 0
    %391 = vmatprep.subr.bf16.mxu0 0
    %392 = vmatpush2.bf16.msra.mxu0 0
    %393 = vmatprep.subr.bf16.mxu0 0
    %394 = vmatpush2.bf16.msra.mxu0 0
    %395 = vmatprep.subr.bf16.mxu0 0
    %396 = vmatpush2.bf16.msra.mxu0 0
    %397 = vmatprep.subr.bf16.mxu0 0
    %398 = vmatpush2.bf16.msra.mxu0 0
    %399 = vmatprep.subr.bf16.mxu0 0
    %400 = vmatpush2.bf16.msra.mxu0 0
    %401 = vmatprep.subr.bf16.mxu0 0
    %402 = vmatpush2.bf16.msra.mxu0 0
    %403 = vmatprep.mubr.bf16.mxu0 0
    %404 = vmatmul.mubr.bf16.gmra.mxu0 %v370
    %v405 = vpop.f32.mrf.mxu0
    %v406 = vadd.f32 %v232, %v405
    %v407 = vpop.f32.mrf.mxu0
    %v408 = vpop.f32.mrf.mxu0
    %v409 = vpop.f32.mrf.mxu0
    %410 = vdwg.mxu0
    %s411 = scalar_lea.vmem [#allocation10], 8
    %v412 = vld [vmem:[%s411] sm:$0xff]
    %vm413 = vcmp.gt.f32.partialorder %v406, %v412
    %v414 = vsel %vm413, 1.0, 0.0
    %v415 = vpack.c.bf16 %v414, %v414
    %v416 = vunpack.c.l.bf16 %v415
    %417 = vst [vmem:[#allocation11] sm:$0xff] %v416
    // Predicated region
    $region50: #{tpu_custom_call.1} parent=1 // pred_check
      _
    $region51: #{tpu_custom_call.1} parent=1 // pred_check_branch
      %419 = sbr.rel (0) target = $region53
    $region52: #{tpu_custom_call.1} parent=1 // pred_region
      %s421 = ssub.s32 128, 128
      %422 = vsyncadd [#allocation4], %s421
      %s424 = sshll.u32 [#allocation11], 4
      %s425 = int_to_ptr.vmem [resolvable:$true] %s424
      %427 = dma.vmem_to_hbm [thread:$0]  %s425, 128, %s7, [#allocation4]
    $region53: #{tpu_custom_call.1} parent=1 // pred_fallthru
      _
    // Predicated region
    $region54: #{tpu_custom_call.1} parent=1 // pred_check
      _
    $region55: #{tpu_custom_call.1} parent=1 // pred_check_branch
      %429 = sbr.rel (0) target = $region57
    $region56: #{tpu_custom_call.1} parent=1 // pred_region
      %430 = dma.done [#allocation4], 128
    $region57: #{tpu_custom_call.1} parent=1 // pred_fallthru
      _
    %431 = vsyncpa [#allocation3], 1
    %432 = vsyncpa [#allocation6], 1
    %433 = vsyncpa [#allocation9], 1
    %434 = vsyncpa [#allocation4], 1

</llo_original>
